<compile_context>
chip_gen: v6e
topology: v6e:2x2x1
jax: 0.10.0
libtpu: 0.0.40
codegen_flags: <defaults>
</compile_context>

<pallas_src>
import functools

import jax
import jax.numpy as jnp
from jax.experimental import pallas as pl
from jax.experimental.pallas import tpu as pltpu


def _round_up(n: int, m: int) -> int:
    return ((n + m - 1) // m) * m


def _linear_kernel(x_ref, w_ref, b_ref, o_ref):
    # x_ref: (TB, D), w_ref: (D, C), b_ref: (1, C), o_ref: (TB, C)
    acc = jnp.dot(x_ref[...], w_ref[...], preferred_element_type=jnp.float32)
    o_ref[...] = (acc + b_ref[...]).astype(o_ref.dtype)


@functools.partial(jax.jit, static_argnames=("block_b",))
def classifier_forward(x, w, b, *, block_b=2048):
    """y = x @ w + b  (== PyTorch fc(x) with w = fc.weight.T, b = fc.bias).

    x: (B, D) float32      D = bottleneck_dim
    w: (D, C) float32      C = num_classes (transpose of PyTorch fc.weight)
    b: (1, C) float32
    returns (B, C) float32
    """
    B, D = x.shape
    C = w.shape[1]

    # Batch tile: multiple of 8 (sublane) or equal to B when B < 8.
    # For B >= 16 this gives >= 2 grid steps so the "parallel" axis can shard
    # across both TensorCores on v7x; capped at block_b for VMEM.
    if B <= 8:
        tb = B
    else:
        tb = max(8, min(block_b, _round_up(pl.cdiv(B, 2), 8)))

    grid = (pl.cdiv(B, tb),)

    flops = 2 * B * D * C
    bytes_accessed = 4 * (B * D + D * C + C + B * C)

    return pl.pallas_call(
        _linear_kernel,
        out_shape=jax.ShapeDtypeStruct((B, C), x.dtype),
        grid=grid,
        in_specs=[
            pl.BlockSpec((tb, D), lambda i: (i, 0)),   # x: streamed over batch
            pl.BlockSpec((D, C), lambda i: (0, 0)),    # weight: VMEM-resident
            pl.BlockSpec((1, C), lambda i: (0, 0)),    # bias:   VMEM-resident
        ],
        out_specs=pl.BlockSpec((tb, C), lambda i: (i, 0)),  # true-width logits
        compiler_params=pltpu.CompilerParams(
            dimension_semantics=("parallel",),
        ),
        cost_estimate=pl.CostEstimate(
            flops=flops, transcendentals=0, bytes_accessed=bytes_accessed),
    )(x, w, b)


def _xavier_normal(key, fan_in, fan_out):
    # torch.nn.init.xavier_normal_: std = sqrt(2 / (fan_in + fan_out)).
    # Generated directly in (in, out) layout (transpose of PyTorch fc.weight).
    std = (2.0 / (fan_in + fan_out)) ** 0.5
    return std * jax.random.normal(key, (fan_in, fan_out), dtype=jnp.float32)


if __name__ == "__main__":
    # Small shapes consistent with the module defaults.
    batch = 8
    bottleneck_dim = 256
    num_classes = 10

    key = jax.random.PRNGKey(0)
    kx, kw = jax.random.split(key)

    x = jax.random.normal(kx, (batch, bottleneck_dim), dtype=jnp.float32)

    # fc: Linear(bottleneck_dim -> num_classes); xavier_normal weight, zero bias.
    w = _xavier_normal(kw, bottleneck_dim, num_classes)
    b = jnp.zeros((1, num_classes), dtype=jnp.float32)

    out = jax.block_until_ready(classifier_forward(x, w, b))
    ref = x @ w + b
    assert out.shape == (batch, num_classes)
    assert jnp.allclose(out, ref, atol=1e-4, rtol=1e-4)

    # Also exercise the non-dividing-grid path (partial final batch block).
    batch2 = 20
    x2 = jax.random.normal(jax.random.PRNGKey(1), (batch2, bottleneck_dim),
                           dtype=jnp.float32)
    out2 = jax.block_until_ready(classifier_forward(x2, w, b))
    ref2 = x2 @ w + b
    assert out2.shape == (batch2, num_classes)
    assert jnp.allclose(out2, ref2, atol=1e-4, rtol=1e-4)

    print("KERNEL_OK")
</pallas_src>

<mosaic_0001>
module attributes {stable_mosaic.version = 11 : i64} {
  func.func @_linear_kernel(%arg0: i32, %arg1: memref<8x256xf32, #tpu.memory_space<vmem>>, %arg2: memref<256x10xf32, #tpu.memory_space<vmem>>, %arg3: memref<1x10xf32, #tpu.memory_space<vmem>>, %arg4: memref<8x10xf32, #tpu.memory_space<vmem>>) attributes {dimension_semantics = [#tpu.dimension_semantics<parallel>], iteration_bounds = array<i64: 1>, scalar_prefetch = 0 : i64, scratch_operands = 0 : i64, tpu.core_type = #tpu.core_type<tc>, window_params = [{transform_indices = @transform_0, window_bounds = array<i64: 8, 256>}, {pipeline_mode = #tpu.pipeline_mode<synchronous>, transform_indices = @transform_1, window_bounds = array<i64: 256, 10>}, {pipeline_mode = #tpu.pipeline_mode<synchronous>, transform_indices = @transform_2, window_bounds = array<i64: 1, 10>}, {transform_indices = @transform_3, window_bounds = array<i64: 8, 10>}]} {
    %c0 = arith.constant 0 : index
    %c0_0 = arith.constant 0 : index
    %0 = vector.load %arg1[%c0, %c0_0] : memref<8x256xf32, #tpu.memory_space<vmem>>, vector<8x256xf32>
    %c0_1 = arith.constant 0 : index
    %c0_2 = arith.constant 0 : index
    %1 = vector.load %arg2[%c0_1, %c0_2] : memref<256x10xf32, #tpu.memory_space<vmem>>, vector<256x10xf32>
    %cst = arith.constant dense<0.000000e+00> : vector<8x10xf32>
    %2 = tpu.matmul %0, %1, %cst {dimension_numbers = #tpu.dot_dimension_numbers<[1], [0], [0], [1], [0, 0, 1, 1], [], []>} : vector<8x256xf32>, vector<256x10xf32>, vector<8x10xf32> -> vector<8x10xf32>
    %c0_3 = arith.constant 0 : index
    %c0_4 = arith.constant 0 : index
    %3 = vector.load %arg3[%c0_3, %c0_4] : memref<1x10xf32, #tpu.memory_space<vmem>>, vector<1x10xf32>
    %4 = vector.broadcast %3 : vector<1x10xf32> to vector<8x10xf32>
    %5 = arith.addf %2, %4 : vector<8x10xf32>
    %c0_5 = arith.constant 0 : index
    %c0_6 = arith.constant 0 : index
    %6 = vector.load %arg4[%c0_5, %c0_6] : memref<8x10xf32, #tpu.memory_space<vmem>>, vector<8x10xf32>
    tpu.vector_store %arg4[%c0_5, %c0_6], %5 {strides = array<i32>} : memref<8x10xf32, #tpu.memory_space<vmem>>, vector<8x10xf32>,
    return
  }
  func.func @transform_0(%arg0: i32) -> (i32, i32) {
    %c0_i32 = arith.constant 0 : i32
    %c0_i32_0 = arith.constant 0 : i32
    return %arg0, %c0_i32 : i32, i32
  }
  func.func @transform_1(%arg0: i32) -> (i32, i32) {
    %c0_i32 = arith.constant 0 : i32
    %c0_i32_0 = arith.constant 0 : i32
    %c0_i32_1 = arith.constant 0 : i32
    return %c0_i32, %c0_i32_0 : i32, i32
  }
  func.func @transform_2(%arg0: i32) -> (i32, i32) {
    %c0_i32 = arith.constant 0 : i32
    %c0_i32_0 = arith.constant 0 : i32
    %c0_i32_1 = arith.constant 0 : i32
    return %c0_i32, %c0_i32_0 : i32, i32
  }
  func.func @transform_3(%arg0: i32) -> (i32, i32) {
    %c0_i32 = arith.constant 0 : i32
    %c0_i32_0 = arith.constant 0 : i32
    return %arg0, %c0_i32 : i32, i32
  }
}

</mosaic_0001>

<llo_original>
// kernel: classifier_forward.1
$region0: #{classifier_forward.1}
  #allocation0 [shape = 'u32[]', space=smem, size = 0x4, offset = 0x4, fixed_abs, tag = 'smem constant byte address 0x4 - core index']
  #allocation1 [shape = 'u32[144,128]{1,0:T(1,128)}', space=vmem, size = 0x12000, scoped, tag = 'internal scratch']
  %s0 = inlined_call_operand.vmem [shape: f32[8,256], index: 0, kind: input, shape index: {}]
  %s1 = inlined_call_operand.vmem [shape: f32[256,10], index: 1, kind: input, shape index: {}]
  %s2 = inlined_call_operand.vmem [shape: f32[1,10], index: 2, kind: input, shape index: {}]
  %s3 = inlined_call_operand.hbm [shape: f32[8,10], index: 3, kind: output, shape index: {}]
  %s4 = sld [smem:[#allocation0]]
  $region22: #{classifier_forward.1} parent=0
    _
  %s6 = ssub.s32 1, %s4
  %s7 = scalar_select 0, %s6, %s4
  $region1: #{classifier_forward.1} parent=0
    #allocation2 [shape = 'u8[4096]{0}', space=vmem, size = 0x1000, scoped, tag = 'output window, operand 0, single buffered']
    #allocation3 [shape = 's32[1]{0}', space=sflag, size = 0x4, scoped, tag = 'scoped memory for classifier_forward.1']
    %8 = vsyncpa [#allocation3], 0
    // Predicated region
    $region2: #{classifier_forward.1} parent=1 // pred_check
      _
    $region3: #{classifier_forward.1} parent=1 // pred_check_branch
      %10 = sbr.rel (0) target = $region5
    $region4: #{classifier_forward.1} parent=1 // pred_region
      _
    $region5: #{classifier_forward.1} parent=1 // pred_fallthru
      _
    // Predicated region
    $region6: #{classifier_forward.1} parent=1 // pred_check
      _
    $region7: #{classifier_forward.1} parent=1 // pred_check_branch
      %12 = sbr.rel (0) target = $region9
    $region8: #{classifier_forward.1} parent=1 // pred_region
      _
    $region9: #{classifier_forward.1} parent=1 // pred_fallthru
      _
    // Predicated region
    $region10: #{classifier_forward.1} parent=1 // pred_check
      _
    $region11: #{classifier_forward.1} parent=1 // pred_check_branch
      %14 = sbr.rel (0) target = $region13
    $region12: #{classifier_forward.1} parent=1 // pred_region
      _
    $region13: #{classifier_forward.1} parent=1 // pred_fallthru
      _
    %v15 = vld [vmem:[%s0] sm:$0xff]
    %v16 = vld [vmem:[%s0 + $0x8] sm:$0xff]
    %v17 = vld [vmem:[%s1] sm:$0xff]
    %v18 = vld [vmem:[%s1 + $0x8] sm:$0xff]
    %v19 = vld [vmem:[%s1 + $0x10] sm:$0xff]
    %v20 = vld [vmem:[%s1 + $0x18] sm:$0xff]
    %v21 = vld [vmem:[%s1 + $0x20] sm:$0xff]
    %v22 = vld [vmem:[%s1 + $0x28] sm:$0xff]
    %v23 = vld [vmem:[%s1 + $0x30] sm:$0xff]
    %v24 = vld [vmem:[%s1 + $0x38] sm:$0xff]
    %v25 = vld [vmem:[%s1 + $0x40] sm:$0xff]
    %v26 = vld [vmem:[%s1 + $0x48] sm:$0xff]
    %v27 = vld [vmem:[%s1 + $0x50] sm:$0xff]
    %v28 = vld [vmem:[%s1 + $0x58] sm:$0xff]
    %v29 = vld [vmem:[%s1 + $0x60] sm:$0xff]
    %v30 = vld [vmem:[%s1 + $0x68] sm:$0xff]
    %v31 = vld [vmem:[%s1 + $0x70] sm:$0xff]
    %v32 = vld [vmem:[%s1 + $0x78] sm:$0xff]
    %v33 = vld [vmem:[%s1 + $0x80] sm:$0xff]
    %v34 = vld [vmem:[%s1 + $0x88] sm:$0xff]
    %v35 = vld [vmem:[%s1 + $0x90] sm:$0xff]
    %v36 = vld [vmem:[%s1 + $0x98] sm:$0xff]
    %v37 = vld [vmem:[%s1 + $0xa0] sm:$0xff]
    %v38 = vld [vmem:[%s1 + $0xa8] sm:$0xff]
    %v39 = vld [vmem:[%s1 + $0xb0] sm:$0xff]
    %v40 = vld [vmem:[%s1 + $0xb8] sm:$0xff]
    %v41 = vld [vmem:[%s1 + $0xc0] sm:$0xff]
    %v42 = vld [vmem:[%s1 + $0xc8] sm:$0xff]
    %v43 = vld [vmem:[%s1 + $0xd0] sm:$0xff]
    %v44 = vld [vmem:[%s1 + $0xd8] sm:$0xff]
    %v45 = vld [vmem:[%s1 + $0xe0] sm:$0xff]
    %v46 = vld [vmem:[%s1 + $0xe8] sm:$0xff]
    %v47 = vld [vmem:[%s1 + $0xf0] sm:$0xff]
    %v48 = vld [vmem:[%s1 + $0xf8] sm:$0xff]
    %v49 = vld [vmem:[%s2] sm:$0x1]
    %v51 = vlaneseq
    %v52 = vshrl.u32 %v51, 7
    %v53 = vsub.s32 0, %v52
    %v54 = vrot.slane %v49, %v53
    %56 = vmatprep.subr.mxu0 0.0
    %57 = vmatpush1.msra.mxu0 %v32
    %58 = vmatprep.subr.mxu0 0.0
    %59 = vmatpush1.msra.mxu0 %v31
    %60 = vmatprep.subr.mxu0 0.0
    %61 = vmatpush1.msra.mxu0 %v30
    %62 = vmatprep.subr.mxu0 0.0
    %63 = vmatpush1.msra.mxu0 %v29
    %64 = vmatprep.subr.mxu0 0.0
    %65 = vmatpush1.msra.mxu0 %v28
    %66 = vmatprep.subr.mxu0 0.0
    %67 = vmatpush1.msra.mxu0 %v27
    %68 = vmatprep.subr.mxu0 0.0
    %69 = vmatpush1.msra.mxu0 %v26
    %70 = vmatprep.subr.mxu0 0.0
    %71 = vmatpush1.msra.mxu0 %v25
    %72 = vmatprep.subr.mxu0 0.0
    %73 = vmatpush1.msra.mxu0 %v24
    %74 = vmatprep.subr.mxu0 0.0
    %75 = vmatpush1.msra.mxu0 %v23
    %76 = vmatprep.subr.mxu0 0.0
    %77 = vmatpush1.msra.mxu0 %v22
    %78 = vmatprep.subr.mxu0 0.0
    %79 = vmatpush1.msra.mxu0 %v21
    %80 = vmatprep.subr.mxu0 0.0
    %81 = vmatpush1.msra.mxu0 %v20
    %82 = vmatprep.subr.mxu0 0.0
    %83 = vmatpush1.msra.mxu0 %v19
    %84 = vmatprep.subr.mxu0 0.0
    %85 = vmatpush1.msra.mxu0 %v18
    %86 = vmatprep.subr.mxu0 0.0
    %87 = vmatpush1.msra.mxu0 %v17
    %88 = vmatprep.subr.mxu0 0.0
    %89 = vmatpush2.msra.mxu0 %v48
    %90 = vmatprep.subr.mxu0 0.0
    %91 = vmatpush2.msra.mxu0 %v47
    %92 = vmatprep.subr.mxu0 0.0
    %93 = vmatpush2.msra.mxu0 %v46
    %94 = vmatprep.subr.mxu0 0.0
    %95 = vmatpush2.msra.mxu0 %v45
    %96 = vmatprep.subr.mxu0 0.0
    %97 = vmatpush2.msra.mxu0 %v44
    %98 = vmatprep.subr.mxu0 0.0
    %99 = vmatpush2.msra.mxu0 %v43
    %100 = vmatprep.subr.mxu0 0.0
    %101 = vmatpush2.msra.mxu0 %v42
    %102 = vmatprep.subr.mxu0 0.0
    %103 = vmatpush2.msra.mxu0 %v41
    %104 = vmatprep.subr.mxu0 0.0
    %105 = vmatpush2.msra.mxu0 %v40
    %106 = vmatprep.subr.mxu0 0.0
    %107 = vmatpush2.msra.mxu0 %v39
    %108 = vmatprep.subr.mxu0 0.0
    %109 = vmatpush2.msra.mxu0 %v38
    %110 = vmatprep.subr.mxu0 0.0
    %111 = vmatpush2.msra.mxu0 %v37
    %112 = vmatprep.subr.mxu0 0.0
    %113 = vmatpush2.msra.mxu0 %v36
    %114 = vmatprep.subr.mxu0 0.0
    %115 = vmatpush2.msra.mxu0 %v35
    %116 = vmatprep.subr.mxu0 0.0
    %117 = vmatpush2.msra.mxu0 %v34
    %118 = vmatprep.subr.mxu0 0.0
    %119 = vmatpush2.msra.mxu0 %v33
    %120 = vmatprep.mubr.f32.mxu0 %v16
    %121 = vmatmul.mubr.f32.gmra.mxu0 %v15
    %v122 = vpop.f32.mrf.mxu0
    %v123 = vadd.f32 %v54, %v122
    %v124 = vpop.f32.mrf.mxu0
    %125 = vdwg.mxu0
    %vm126 = vcmask 80896
    %127 = vst.msk [vmem:[#allocation2] sm:$0xff] %vm126, %v123
    // Predicated region
    $region14: #{classifier_forward.1} parent=1 // pred_check
      _
    $region15: #{classifier_forward.1} parent=1 // pred_check_branch
      %129 = sbr.rel (0) target = $region17
    $region16: #{classifier_forward.1} parent=1 // pred_region
      %s131 = ssub.s32 128, 128
      %132 = vsyncadd [#allocation3], %s131
      %s134 = sshll.u32 [#allocation2], 4
      %s135 = int_to_ptr.vmem [resolvable:$true] %s134
      %137 = dma.vmem_to_hbm [thread:$0]  %s135, 128, %s3, [#allocation3]
    $region17: #{classifier_forward.1} parent=1 // pred_fallthru
      _
    // Predicated region
    $region18: #{classifier_forward.1} parent=1 // pred_check
      _
    $region19: #{classifier_forward.1} parent=1 // pred_check_branch
      %139 = sbr.rel (0) target = $region21
    $region20: #{classifier_forward.1} parent=1 // pred_region
      %140 = dma.done [#allocation3], 128
    $region21: #{classifier_forward.1} parent=1 // pred_fallthru
      _
    %141 = vsyncpa [#allocation3], 1

</llo_original>
